<compile_context>
chip_gen: v6e
topology: v6e:2x2x1
jax: 0.10.0
libtpu: 0.0.40
codegen_flags: <defaults>
</compile_context>

<pallas_src>
import functools

import jax
import jax.numpy as jnp
from jax.experimental import pallas as pl
from jax.experimental.pallas import tpu as pltpu

_BN_EPS = 1e-5


# -------------------- small helpers --------------------

@functools.lru_cache(maxsize=1)
def _vmem_limit():
    """~75% of physical VMEM; conservative 48 MiB fallback (v7x-safe)."""
    try:
        info = pltpu.get_tpu_info()
        cap = getattr(info, "vmem_capacity_bytes", None)
        if cap:
            return int(cap) * 3 // 4
    except Exception:
        pass
    return 48 * 1024 * 1024


def _affine_act(acc, scale, shift, act):
    y = acc * scale + shift
    if act == "relu":
        y = jnp.maximum(y, 0.0)
    elif act == "silu":
        y = y * jax.nn.sigmoid(y)
    return y


def _bn_fold(bn):
    scale = bn["gamma"] / jnp.sqrt(bn["var"] + _BN_EPS)
    shift = bn["beta"] - bn["mean"] * scale
    return scale.astype(jnp.float32), shift.astype(jnp.float32)


def _pick_m_tile(M):
    """Largest pixel tile (multiple of 8) dividing M; else pad M up."""
    for t in (1024, 512, 256, 128, 64, 32, 16, 8):
        if M % t == 0:
            return t, M
    t = 512 if M > 512 else 8
    return t, ((M + t - 1) // t) * t


def _pick_band(H, W, cout_blk):
    """Rows-of-H per conv3x3 band: keep the f32 accumulator ~<= 2 MiB."""
    target = max(W, (2 * 1024 * 1024) // max(1, 4 * cout_blk))
    best = H
    for bh in range(H, 0, -1):
        if H % bh:
            continue
        if (bh * W) % 8 != 0 and bh != H:   # (8,128) block constraint
            continue
        best = bh
        if bh * W <= target:
            break
    return best


# -------------------- Pallas kernels --------------------

def _mm_bn_act_kernel(a_ref, w_ref, sc_ref, sh_ref, o_ref, *, act):
    """o = act((a @ w) * scale + shift); single-K-tile fast path."""
    acc = jnp.dot(a_ref[...], w_ref[...], preferred_element_type=jnp.float32)
    o_ref[...] = _affine_act(acc, sc_ref[...], sh_ref[...], act).astype(o_ref.dtype)


def _mm_bn_act_ktiled_kernel(a_ref, w_ref, sc_ref, sh_ref, o_ref, acc_ref, *, act):
    """K-tiled variant with an f32 VMEM accumulator (only used for huge K)."""
    @pl.when(pl.program_id(1) == 0)
    def _():
        acc_ref[...] = jnp.zeros_like(acc_ref)

    acc_ref[...] += jnp.dot(a_ref[...], w_ref[...],
                            preferred_element_type=jnp.float32)

    @pl.when(pl.program_id(1) == pl.num_programs(1) - 1)
    def _():
        y = _affine_act(acc_ref[...], sc_ref[...], sh_ref[...], act)
        o_ref[...] = y.astype(o_ref.dtype)


def _mm2_bn_act_kernel(a1_ref, a2_ref, w1_ref, w2_ref, sc_ref, sh_ref, o_ref,
                       *, act):
    """Fused concat matmul: o = act((a1@w1 + a2@w2) * scale + shift)."""
    acc = jnp.dot(a1_ref[...], w1_ref[...], preferred_element_type=jnp.float32)
    acc += jnp.dot(a2_ref[...], w2_ref[...], preferred_element_type=jnp.float32)
    o_ref[...] = _affine_act(acc, sc_ref[...], sh_ref[...], act).astype(o_ref.dtype)


def _ve_att_kernel(k1_ref, x_ref, wv_ref, w1a_ref, w1b_ref, wf_ref,
                   scv_ref, shv_ref, sc1_ref, sh1_ref, bf_ref,
                   v_ref, att_ref):
    """Fused CoT value_embed + attention_embed (a1 never written to HBM).

      v   = affine(x @ Wv)                     -> bf16
      a1  = relu(affine(k1 @ W1a + x @ W1b))   -> stays in vregs
      att = a1 @ Wf + bf                       -> f32 (softmax input)
    """
    x = x_ref[...]
    k1 = k1_ref[...]

    v = jnp.dot(x, wv_ref[...], preferred_element_type=jnp.float32)
    v_ref[...] = (v * scv_ref[...] + shv_ref[...]).astype(v_ref.dtype)

    a1 = jnp.dot(k1, w1a_ref[...], preferred_element_type=jnp.float32)
    a1 = a1 + jnp.dot(x, w1b_ref[...], preferred_element_type=jnp.float32)
    a1 = jnp.maximum(a1 * sc1_ref[...] + sh1_ref[...], 0.0)

    att = jnp.dot(a1.astype(jnp.bfloat16), wf_ref[...],
                  preferred_element_type=jnp.float32)
    att_ref[...] = att + bf_ref[...]


def _conv3x3_kernel(x_ref, w_ref, sc_ref, sh_ref, o_ref, *, W, band_hw, act):
    """3x3 conv (pad=1) on one (batch, group-block, row-band).

    x_ref: (1, (H+4)*W, cin_blk)  -- input padded with 2 zero rows top/bottom,
                                     flattened over spatial (single HBM copy).
    w_ref: (1, 9, cin_blk, cout_blk); tap index = ky*3 + kx.
    o_ref: (1, band_hw, cout_blk).

    Tap (ky, kx) of output flat pixel p is the padded flat pixel
    p + (ky+1)*W + (kx-1); horizontal wrap-around at row edges is removed with
    a per-column mask (kx=0 kills col 0, kx=2 kills col W-1).
    """
    q = pl.program_id(2)
    row0 = q * band_hw
    col = jax.lax.broadcasted_iota(jnp.int32, (band_hw, 1), 0) % W
    left_ok = col != 0
    right_ok = col != (W - 1)

    acc = None
    for ky in range(3):
        for kx in range(3):
            s = row0 + (ky + 1) * W + (kx - 1)
            a = x_ref[0, pl.ds(s, band_hw), :]
            if kx == 0:
                a = jnp.where(left_ok, a, jnp.zeros_like(a))
            elif kx == 2:
                a = jnp.where(right_ok, a, jnp.zeros_like(a))
            part = jnp.dot(a, w_ref[0, ky * 3 + kx],
                           preferred_element_type=jnp.float32)
            acc = part if acc is None else acc + part

    y = _affine_act(acc, sc_ref[0], sh_ref[0], act)
    o_ref[0] = y.astype(o_ref.dtype)


def _cot_combine_kernel(k1_ref, v_ref, att_ref, o_ref):
    """o = k1 + softmax(att over spatial) * v, one (batch, channel-tile)."""
    att = att_ref[0]                                   # (HW, ct) f32
    m = jnp.max(att, axis=0, keepdims=True)
    e = jnp.exp(att - m)
    s = jnp.sum(e, axis=0, keepdims=True)
    inv = 1.0 / s                                      # exact (tiny row)
    out = k1_ref[0].astype(jnp.float32) + (e * inv) * v_ref[0].astype(jnp.float32)
    o_ref[0] = out.astype(o_ref.dtype)


# -------------------- kernel wrappers --------------------

def matmul_bn_act(a, w, scale, shift, act="none", out_dtype=jnp.bfloat16):
    """Fused (M, K) @ (K, N) + per-channel affine + activation."""
    M, K = a.shape
    K2, N = w.shape
    assert K == K2, (K, K2)
    a = a.astype(jnp.bfloat16)
    w = w.astype(jnp.bfloat16)
    tm, Mp = _pick_m_tile(M)
    if Mp != M:
        a = jnp.pad(a, ((0, Mp - M), (0, 0)))
    sc = scale.reshape(1, N).astype(jnp.float32)
    sh = shift.reshape(1, N).astype(jnp.float32)
    params = pltpu.CompilerParams(dimension_semantics=("parallel",),
                                  vmem_limit_bytes=_vmem_limit())

    if K <= 2048:   # every 1x1 conv in this model: single K tile, no scratch
        out = pl.pallas_call(
            functools.partial(_mm_bn_act_kernel, act=act),
            out_shape=jax.ShapeDtypeStruct((Mp, N), out_dtype),
            grid=(Mp // tm,),
            in_specs=[
                pl.BlockSpec((tm, K), lambda i: (i, 0)),
                pl.BlockSpec((K, N), lambda i: (0, 0)),
                pl.BlockSpec((1, N), lambda i: (0, 0)),
                pl.BlockSpec((1, N), lambda i: (0, 0)),
            ],
            out_specs=pl.BlockSpec((tm, N), lambda i: (i, 0)),
            compiler_params=params,
        )(a, w, sc, sh)
    else:
        tk = 512
        Kp = ((K + tk - 1) // tk) * tk
        if Kp != K:
            a = jnp.pad(a, ((0, 0), (0, Kp - K)))
            w = jnp.pad(w, ((0, Kp - K), (0, 0)))
        out = pl.pallas_call(
            functools.partial(_mm_bn_act_ktiled_kernel, act=act),
            out_shape=jax.ShapeDtypeStruct((Mp, N), out_dtype),
            grid=(Mp // tm, Kp // tk),
            in_specs=[
                pl.BlockSpec((tm, tk), lambda i, k: (i, k)),
                pl.BlockSpec((tk, N), lambda i, k: (k, 0)),
                pl.BlockSpec((1, N), lambda i, k: (0, 0)),
                pl.BlockSpec((1, N), lambda i, k: (0, 0)),
            ],
            out_specs=pl.BlockSpec((tm, N), lambda i, k: (i, 0)),
            scratch_shapes=[pltpu.VMEM((tm, N), jnp.float32)],
            compiler_params=pltpu.CompilerParams(
                dimension_semantics=("parallel", "arbitrary"),
                vmem_limit_bytes=_vmem_limit()),
        )(a, w, sc, sh)
    return out[:M] if Mp != M else out


def matmul2_bn_act(a1, a2, w1, w2, scale, shift, act="none",
                   out_dtype=jnp.bfloat16):
    """Fused concat([a1, a2]) @ concat([w1; w2]) + affine + activation."""
    M, K1 = a1.shape
    K2 = a2.shape[1]
    N = w1.shape[1]
    a1 = a1.astype(jnp.bfloat16)
    a2 = a2.astype(jnp.bfloat16)
    w1 = w1.astype(jnp.bfloat16)
    w2 = w2.astype(jnp.bfloat16)
    tm, Mp = _pick_m_tile(M)
    if Mp != M:
        a1 = jnp.pad(a1, ((0, Mp - M), (0, 0)))
        a2 = jnp.pad(a2, ((0, Mp - M), (0, 0)))
    out = pl.pallas_call(
        functools.partial(_mm2_bn_act_kernel, act=act),
        out_shape=jax.ShapeDtypeStruct((Mp, N), out_dtype),
        grid=(Mp // tm,),
        in_specs=[
            pl.BlockSpec((tm, K1), lambda i: (i, 0)),
            pl.BlockSpec((tm, K2), lambda i: (i, 0)),
            pl.BlockSpec((K1, N), lambda i: (0, 0)),
            pl.BlockSpec((K2, N), lambda i: (0, 0)),
            pl.BlockSpec((1, N), lambda i: (0, 0)),
            pl.BlockSpec((1, N), lambda i: (0, 0)),
        ],
        out_specs=pl.BlockSpec((tm, N), lambda i: (i, 0)),
        compiler_params=pltpu.CompilerParams(
            dimension_semantics=("parallel",),
            vmem_limit_bytes=_vmem_limit()),
    )(a1, a2, w1, w2, scale.reshape(1, N).astype(jnp.float32),
      shift.reshape(1, N).astype(jnp.float32))
    return out[:M] if Mp != M else out


def conv1x1_bn_act(x_flat, w, bn, act, out_dtype=jnp.bfloat16):
    """x_flat: (B*H*W, Cin); w: torch-layout (Cout, Cin, 1, 1)."""
    cout, cin = w.shape[0], w.shape[1]
    wm = w.reshape(cout, cin).T
    scale, shift = _bn_fold(bn)
    return matmul_bn_act(x_flat, wm, scale, shift, act, out_dtype)


def conv3x3_bn_act(x_nhwc, w, bn, act, groups=1):
    """3x3 conv, padding=1, stride=1.  Single padded HBM copy; in-kernel taps.

    x_nhwc: (B, H, W, C); w: torch-layout (Cout, Cin/groups, 3, 3).
    Returns (B*H*W, Cout) bf16 in natural (grouped) channel order.
    """
    B, H, W, C = x_nhwc.shape
    cout = w.shape[0]
    G = groups
    cig, cog = C // G, cout // G
    assert cig == w.shape[1], (cig, w.shape)

    # One padded copy: 2 zero rows top+bottom (so every tap shift is >= 0 and
    # every contiguous flat slice stays in bounds); no W padding (edge columns
    # are masked in-kernel).
    xpad = jnp.pad(x_nhwc.astype(jnp.bfloat16), ((0, 0), (2, 2), (0, 0), (0, 0)))
    PAD = (H + 4) * W
    xflat = xpad.reshape(B, PAD, C)

    scale, shift = _bn_fold(bn)

    # Per-group weights (G, 9, cig, cog), tap = ky*3 + kx.
    wt = jnp.transpose(w.reshape(G, cog, cig, 3, 3),
                       (0, 3, 4, 2, 1)).reshape(G, 9, cig, cog)

    use_group_grid = (G > 1 and cig % 128 == 0 and cog % 128 == 0)
    if use_group_grid:
        wk = wt.astype(jnp.bfloat16)                       # (G, 9, cig, cog)
        G_k, cin_blk, cout_blk = G, cig, cog
    else:
        # Block-diagonal weights: one lane-dense matmul per tap (MXU tile is
        # padded to 128 anyway when cig < 128, so this costs no extra MXU time
        # and removes the per-group grid axis + masked stores).
        wbd = jnp.zeros((9, C, cout), jnp.float32)
        for g in range(G):
            wbd = wbd.at[:, g * cig:(g + 1) * cig,
                         g * cog:(g + 1) * cog].set(wt[g])
        wk = wbd[None].astype(jnp.bfloat16)                # (1, 9, C, cout)
        G_k, cin_blk, cout_blk = 1, C, cout

    sc = scale.reshape(G_k, 1, cout_blk)
    sh = shift.reshape(G_k, 1, cout_blk)

    HW = H * W
    bh = _pick_band(H, W, cout_blk)
    NB = H // bh
    bHW = bh * W

    out = pl.pallas_call(
        functools.partial(_conv3x3_kernel, W=W, band_hw=bHW, act=act),
        out_shape=jax.ShapeDtypeStruct((B, HW, cout), jnp.bfloat16),
        grid=(B, G_k, NB),
        in_specs=[
            pl.BlockSpec((1, PAD, cin_blk), lambda b, g, q: (b, 0, g)),
            pl.BlockSpec((1, 9, cin_blk, cout_blk), lambda b, g, q: (g, 0, 0, 0)),
            pl.BlockSpec((1, 1, cout_blk), lambda b, g, q: (g, 0, 0)),
            pl.BlockSpec((1, 1, cout_blk), lambda b, g, q: (g, 0, 0)),
        ],
        out_specs=pl.BlockSpec((1, bHW, cout_blk), lambda b, g, q: (b, q, g)),
        compiler_params=pltpu.CompilerParams(
            dimension_semantics=("parallel", "parallel", "parallel"),
            vmem_limit_bytes=_vmem_limit()),
    )(xflat, wk, sc, sh)
    return out.reshape(B * HW, cout)


def value_and_attention(k1_flat, x_flat, p):
    """Fused value_embed + attention_embed[0] + attention_embed[-1]."""
    M, C = x_flat.shape
    cmid = p["ae1_w"].shape[0]                             # 2*dim // 4

    wv = p["ve_w"].reshape(C, C).T.astype(jnp.bfloat16)
    scv, shv = _bn_fold(p["ve_bn"])

    wm1 = p["ae1_w"].reshape(cmid, 2 * C).T                # (2C, cmid)
    w1a = wm1[:C].astype(jnp.bfloat16)                     # applied to k1
    w1b = wm1[C:].astype(jnp.bfloat16)                     # applied to x
    sc1, sh1 = _bn_fold(p["ae1_bn"])

    # attention_embed[-1] with the 9-tap mean folded in (exact: layer linear).
    wf = p["ae2_w"].reshape(C, 9, cmid).mean(axis=1).T.astype(jnp.bfloat16)
    bf = p["ae2_b"].reshape(C, 9).mean(axis=1).astype(jnp.float32)

    k1 = k1_flat.astype(jnp.bfloat16)
    x = x_flat.astype(jnp.bfloat16)
    tm, Mp = _pick_m_tile(M)
    if Mp != M:
        k1 = jnp.pad(k1, ((0, Mp - M), (0, 0)))
        x = jnp.pad(x, ((0, Mp - M), (0, 0)))

    def row(a):
        return a.reshape(1, -1).astype(jnp.float32)

    def full(shape):
        return pl.BlockSpec(shape, lambda i: (0, 0))

    v, att = pl.pallas_call(
        _ve_att_kernel,
        out_shape=(jax.ShapeDtypeStruct((Mp, C), jnp.bfloat16),
                   jax.ShapeDtypeStruct((Mp, C), jnp.float32)),
        grid=(Mp // tm,),
        in_specs=[
            pl.BlockSpec((tm, C), lambda i: (i, 0)),       # k1
            pl.BlockSpec((tm, C), lambda i: (i, 0)),       # x
            full((C, C)), full((C, cmid)), full((C, cmid)), full((cmid, C)),
            full((1, C)), full((1, C)), full((1, cmid)), full((1, cmid)),
            full((1, C)),
        ],
        out_specs=(pl.BlockSpec((tm, C), lambda i: (i, 0)),
                   pl.BlockSpec((tm, C), lambda i: (i, 0))),
        compiler_params=pltpu.CompilerParams(
            dimension_semantics=("parallel",),
            vmem_limit_bytes=_vmem_limit()),
    )(k1, x, wv, w1a, w1b, wf, row(scv), row(shv), row(sc1), row(sh1), row(bf))
    if Mp != M:
        v, att = v[:M], att[:M]
    return v, att


def cot_combine(k1, v, att):
    """k1 + softmax(att over HW) * v.  k1/v bf16, att f32; channel-tiled."""
    B, HW, C = k1.shape
    ct = 128 if (C % 128 == 0) else C
    spec = pl.BlockSpec((1, HW, ct), lambda b, c: (b, 0, c))
    return pl.pallas_call(
        _cot_combine_kernel,
        out_shape=jax.ShapeDtypeStruct((B, HW, C), jnp.bfloat16),
        grid=(B, C // ct),
        in_specs=[spec, spec, spec],
        out_specs=spec,
        compiler_params=pltpu.CompilerParams(
            dimension_semantics=("parallel", "parallel"),
            vmem_limit_bytes=_vmem_limit()),
    )(k1, v, att)


# -------------------- module forward passes --------------------

def cot_attention(x_nhwc, p):
    """CoTAttention.forward (dim = C, kernel_size = 3)."""
    B, H, W, C = x_nhwc.shape
    HW = H * W
    x_flat = x_nhwc.reshape(B * HW, C)

    # key_embed: 3x3 grouped conv (groups=4) + BN + ReLU
    k1_flat = conv3x3_bn_act(x_nhwc, p["ke_w"], p["ke_bn"], "relu", groups=4)

    # value_embed + attention_embed (both convs) fused into one kernel.
    v_flat, att_flat = value_and_attention(k1_flat, x_flat, p)

    k1 = k1_flat.reshape(B, HW, C)
    v = v_flat.reshape(B, HW, C)
    att = att_flat.reshape(B, HW, C)
    out = cot_combine(k1, v, att)                          # k1 + softmax(att)*v
    return out.reshape(B, H, W, C)


def cot_bottleneck(x_nhwc, p):
    """CoT_Bottleneck.forward (e=1.0 inside C3)."""
    B, H, W, C = x_nhwc.shape
    xf = x_nhwc.reshape(B * H * W, C)
    h1 = conv1x1_bn_act(xf, p["cv1_w"], p["cv1_bn"], "silu").reshape(B, H, W, -1)
    h2 = conv3x3_bn_act(h1, p["cv2_w"], p["cv2_bn"], "silu", groups=1)
    h2 = h2.reshape(B, H, W, -1)
    h3 = cot_attention(h2, p["cota"])
    return x_nhwc + h3 if p["add"] else h3


def c3_cot_attention(x_nchw, p):
    """C3_CoTAttention.forward.  Input/output NCHW (f32)."""
    # Cast to bf16 BEFORE the layout transpose (halves the relayout traffic).
    x = jnp.transpose(x_nchw.astype(jnp.bfloat16), (0, 2, 3, 1))   # NCHW -> NHWC
    B, H, W, C = x.shape
    xf = x.reshape(B * H * W, C)

    a = conv1x1_bn_act(xf, p["cv1_w"], p["cv1_bn"], "silu").reshape(B, H, W, -1)
    for bp in p["m"]:
        a = cot_bottleneck(a, bp)
    b = conv1x1_bn_act(xf, p["cv2_w"], p["cv2_bn"], "silu")

    # cv3 on cat([a, b]) -- concat fused into a dual-input matmul.
    c_ = b.shape[-1]
    c2 = p["cv3_w"].shape[0]
    wm3 = p["cv3_w"].reshape(c2, 2 * c_).T                 # (2c_, c2)
    sc3, sh3 = _bn_fold(p["cv3_bn"])
    out = matmul2_bn_act(a.reshape(B * H * W, c_), b, wm3[:c_], wm3[c_:],
                         sc3, sh3, "silu", out_dtype=jnp.float32)
    return jnp.transpose(out.reshape(B, H, W, c2), (0, 3, 1, 2))   # NHWC -> NCHW


# -------------------- deterministic parameter init --------------------

def _conv_w(key, cout, cin, k):
    return 0.1 * jax.random.normal(key, (cout, cin, k, k), jnp.float32)


def _bn_params(key, c):
    k1, k2, k3, k4 = jax.random.split(key, 4)
    return dict(
        gamma=1.0 + 0.1 * jax.random.normal(k1, (c,), jnp.float32),
        beta=0.1 * jax.random.normal(k2, (c,), jnp.float32),
        mean=0.05 * jax.random.normal(k3, (c,), jnp.float32),
        var=1.0 + 0.1 * jax.random.uniform(k4, (c,), jnp.float32),
    )


def init_cot_params(key, dim):
    ks = jax.random.split(key, 8)
    return dict(
        ke_w=_conv_w(ks[0], dim, dim // 4, 3),            # groups=4
        ke_bn=_bn_params(ks[1], dim),
        ve_w=_conv_w(ks[2], dim, dim, 1),
        ve_bn=_bn_params(ks[3], dim),
        ae1_w=_conv_w(ks[4], 2 * dim // 4, 2 * dim, 1),
        ae1_bn=_bn_params(ks[5], 2 * dim // 4),
        ae2_w=_conv_w(ks[6], 9 * dim, 2 * dim // 4, 1),
        ae2_b=0.05 * jax.random.normal(ks[7], (9 * dim,), jnp.float32),
    )


def init_bottleneck_params(key, c1, c2, shortcut=True):
    ks = jax.random.split(key, 5)
    c_ = c2  # e=1.0 inside C3
    return dict(
        cv1_w=_conv_w(ks[0], c_, c1, 1), cv1_bn=_bn_params(ks[1], c_),
        cv2_w=_conv_w(ks[2], c2, c_, 3), cv2_bn=_bn_params(ks[3], c2),
        cota=init_cot_params(ks[4], c2),
        add=bool(shortcut and c1 == c2),
    )


def init_c3_params(key, c1, c2, n=1, shortcut=True, e=0.5):
    c_ = int(c2 * e)
    ks = jax.random.split(key, 6 + n)
    return dict(
        cv1_w=_conv_w(ks[0], c_, c1, 1), cv1_bn=_bn_params(ks[1], c_),
        cv2_w=_conv_w(ks[2], c_, c1, 1), cv2_bn=_bn_params(ks[3], c_),
        cv3_w=_conv_w(ks[4], c2, 2 * c_, 1), cv3_bn=_bn_params(ks[5], c2),
        m=[init_bottleneck_params(ks[6 + i], c_, c_, shortcut) for i in range(n)],
    )


if __name__ == "__main__":
    key = jax.random.PRNGKey(0)
    kx, kp = jax.random.split(key)
    # small shapes: c_ = c2*e = 8 must be divisible by 4 (CoT grouped conv)
    B, C1, C2, H, W = 2, 16, 16, 8, 8
    x = jax.random.normal(kx, (B, C1, H, W), jnp.float32)
    params = init_c3_params(kp, C1, C2, n=1, shortcut=True, e=0.5)

    out = c3_cot_attention(x, params)
    out = jax.block_until_ready(out)

    assert out.shape == (B, C2, H, W), out.shape
    assert bool(jnp.all(jnp.isfinite(out)))
    print("KERNEL_OK")
</pallas_src>

<mosaic_0001>
module attributes {stable_mosaic.version = 11 : i64} {
  func.func @_mm_bn_act_kernel(%arg0: i32, %arg1: memref<128x16xbf16, #tpu.memory_space<vmem>>, %arg2: memref<16x8xbf16, #tpu.memory_space<vmem>>, %arg3: memref<1x8xf32, #tpu.memory_space<vmem>>, %arg4: memref<1x8xf32, #tpu.memory_space<vmem>>, %arg5: memref<128x8xbf16, #tpu.memory_space<vmem>>) attributes {dimension_semantics = [#tpu.dimension_semantics<parallel>], iteration_bounds = array<i64: 1>, scalar_prefetch = 0 : i64, scratch_operands = 0 : i64, tpu.core_type = #tpu.core_type<tc>, window_params = [{transform_indices = @transform_0, window_bounds = array<i64: 128, 16>}, {pipeline_mode = #tpu.pipeline_mode<synchronous>, transform_indices = @transform_1, window_bounds = array<i64: 16, 8>}, {pipeline_mode = #tpu.pipeline_mode<synchronous>, transform_indices = @transform_2, window_bounds = array<i64: 1, 8>}, {pipeline_mode = #tpu.pipeline_mode<synchronous>, transform_indices = @transform_3, window_bounds = array<i64: 1, 8>}, {transform_indices = @transform_4, window_bounds = array<i64: 128, 8>}]} {
    %c0 = arith.constant 0 : index
    %c0_0 = arith.constant 0 : index
    %0 = vector.load %arg1[%c0, %c0_0] : memref<128x16xbf16, #tpu.memory_space<vmem>>, vector<128x16xbf16>
    %c0_1 = arith.constant 0 : index
    %c0_2 = arith.constant 0 : index
    %1 = vector.load %arg2[%c0_1, %c0_2] : memref<16x8xbf16, #tpu.memory_space<vmem>>, vector<16x8xbf16>
    %cst = arith.constant dense<0.000000e+00> : vector<128x8xf32>
    %2 = tpu.matmul %0, %1, %cst {dimension_numbers = #tpu.dot_dimension_numbers<[1], [0], [0], [1], [0, 0, 1, 1], [], []>} : vector<128x16xbf16>, vector<16x8xbf16>, vector<128x8xf32> -> vector<128x8xf32>
    %c0_3 = arith.constant 0 : index
    %c0_4 = arith.constant 0 : index
    %3 = vector.load %arg3[%c0_3, %c0_4] : memref<1x8xf32, #tpu.memory_space<vmem>>, vector<1x8xf32>
    %c0_5 = arith.constant 0 : index
    %c0_6 = arith.constant 0 : index
    %4 = vector.load %arg4[%c0_5, %c0_6] : memref<1x8xf32, #tpu.memory_space<vmem>>, vector<1x8xf32>
    %5 = vector.broadcast %3 : vector<1x8xf32> to vector<128x8xf32>
    %6 = arith.mulf %2, %5 : vector<128x8xf32>
    %7 = vector.broadcast %4 : vector<1x8xf32> to vector<128x8xf32>
    %8 = arith.addf %6, %7 : vector<128x8xf32>
    %9 = arith.negf %8 : vector<128x8xf32>
    %10 = math.exp %9 : vector<128x8xf32>
    %cst_7 = arith.constant 1.000000e+00 : f32
    %11 = vector.broadcast %cst_7 : f32 to vector<128x8xf32>
    %12 = arith.addf %11, %10 : vector<128x8xf32>
    %13 = arith.divf %11, %12 : vector<128x8xf32>
    %14 = arith.mulf %8, %13 : vector<128x8xf32>
    %15 = arith.truncf %14 : vector<128x8xf32> to vector<128x8xbf16>
    %c0_8 = arith.constant 0 : index
    %c0_9 = arith.constant 0 : index
    %16 = vector.load %arg5[%c0_8, %c0_9] : memref<128x8xbf16, #tpu.memory_space<vmem>>, vector<128x8xbf16>
    tpu.vector_store %arg5[%c0_8, %c0_9], %15 {strides = array<i32>} : memref<128x8xbf16, #tpu.memory_space<vmem>>, vector<128x8xbf16>,
    return
  }
  func.func @transform_0(%arg0: i32) -> (i32, i32) {
    %c0_i32 = arith.constant 0 : i32
    %c0_i32_0 = arith.constant 0 : i32
    return %arg0, %c0_i32 : i32, i32
  }
  func.func @transform_1(%arg0: i32) -> (i32, i32) {
    %c0_i32 = arith.constant 0 : i32
    %c0_i32_0 = arith.constant 0 : i32
    %c0_i32_1 = arith.constant 0 : i32
    return %c0_i32, %c0_i32_0 : i32, i32
  }
  func.func @transform_2(%arg0: i32) -> (i32, i32) {
    %c0_i32 = arith.constant 0 : i32
    %c0_i32_0 = arith.constant 0 : i32
    %c0_i32_1 = arith.constant 0 : i32
    return %c0_i32, %c0_i32_0 : i32, i32
  }
  func.func @transform_3(%arg0: i32) -> (i32, i32) {
    %c0_i32 = arith.constant 0 : i32
    %c0_i32_0 = arith.constant 0 : i32
    %c0_i32_1 = arith.constant 0 : i32
    return %c0_i32, %c0_i32_0 : i32, i32
  }
  func.func @transform_4(%arg0: i32) -> (i32, i32) {
    %c0_i32 = arith.constant 0 : i32
    %c0_i32_0 = arith.constant 0 : i32
    return %arg0, %c0_i32 : i32, i32
  }
}

</mosaic_0001>

<llo_original>
// kernel: tpu_custom_call.1
$region0: #{tpu_custom_call.1}
  #allocation0 [shape = 'u32[]', space=smem, size = 0x4, offset = 0x4, fixed_abs, tag = 'smem constant byte address 0x4 - core index']
  #allocation1 [shape = 'u32[144,128]{1,0:T(1,128)}', space=vmem, size = 0x12000, scoped, tag = 'internal scratch']
  %s0 = inlined_call_operand.vmem [shape: bf16[128,16], index: 0, kind: input, shape index: {}]
  %s1 = inlined_call_operand.vmem [shape: bf16[16,8], index: 1, kind: input, shape index: {}]
  %s2 = inlined_call_operand.vmem [shape: f32[1,8], index: 2, kind: input, shape index: {}]
  %s3 = inlined_call_operand.vmem [shape: f32[1,8], index: 3, kind: input, shape index: {}]
  %s4 = inlined_call_operand.vmem [shape: bf16[128,8], index: 4, kind: output, shape index: {}]
  %s5 = sld [smem:[#allocation0]]
  $region26: #{tpu_custom_call.1} parent=0
    _
  %s7 = ssub.s32 1, %s5
  %s8 = scalar_select 0, %s7, %s5
  // Predicated region
  $region2: #{tpu_custom_call.1} parent=0 // pred_check
    _
  $region3: #{tpu_custom_call.1} parent=0 // pred_check_branch
    %10 = sbr.rel (0) target = $region5
  $region4: #{tpu_custom_call.1} parent=0 // pred_region
    _
  $region5: #{tpu_custom_call.1} parent=0 // pred_fallthru
    _
  // Predicated region
  $region6: #{tpu_custom_call.1} parent=0 // pred_check
    _
  $region7: #{tpu_custom_call.1} parent=0 // pred_check_branch
    %12 = sbr.rel (0) target = $region9
  $region8: #{tpu_custom_call.1} parent=0 // pred_region
    _
  $region9: #{tpu_custom_call.1} parent=0 // pred_fallthru
    _
  // Predicated region
  $region10: #{tpu_custom_call.1} parent=0 // pred_check
    _
  $region11: #{tpu_custom_call.1} parent=0 // pred_check_branch
    %14 = sbr.rel (0) target = $region13
  $region12: #{tpu_custom_call.1} parent=0 // pred_region
    _
  $region13: #{tpu_custom_call.1} parent=0 // pred_fallthru
    _
  // Predicated region
  $region14: #{tpu_custom_call.1} parent=0 // pred_check
    _
  $region15: #{tpu_custom_call.1} parent=0 // pred_check_branch
    %16 = sbr.rel (0) target = $region17
  $region16: #{tpu_custom_call.1} parent=0 // pred_region
    _
  $region17: #{tpu_custom_call.1} parent=0 // pred_fallthru
    _
  %v18 = vld [vmem:[%s0] sm:$0xf]
  %v19 = vld [vmem:[%s0 + $0x4] sm:$0xf]
  %v20 = vld [vmem:[%s0 + $0x8] sm:$0xf]
  %v21 = vld [vmem:[%s0 + $0xc] sm:$0xf]
  %v22 = vld [vmem:[%s0 + $0x10] sm:$0xf]
  %v23 = vld [vmem:[%s0 + $0x14] sm:$0xf]
  %v24 = vld [vmem:[%s0 + $0x18] sm:$0xf]
  %v25 = vld [vmem:[%s0 + $0x1c] sm:$0xf]
  %v26 = vld [vmem:[%s0 + $0x20] sm:$0xf]
  %v27 = vld [vmem:[%s0 + $0x24] sm:$0xf]
  %v28 = vld [vmem:[%s0 + $0x28] sm:$0xf]
  %v29 = vld [vmem:[%s0 + $0x2c] sm:$0xf]
  %v30 = vld [vmem:[%s0 + $0x30] sm:$0xf]
  %v31 = vld [vmem:[%s0 + $0x34] sm:$0xf]
  %v32 = vld [vmem:[%s0 + $0x38] sm:$0xf]
  %v33 = vld [vmem:[%s0 + $0x3c] sm:$0xf]
  %v34 = vld [vmem:[%s1] sm:$0xf]
  %v35 = vld [vmem:[%s1 + $0x4] sm:$0xf]
  %v52 = vunpack.c.l.b16 %v18
  %v53 = vunpack.c.l.b16 %v19
  %v54 = vunpack.c.l.b16 %v20
  %v55 = vunpack.c.l.b16 %v21
  %v56 = vunpack.c.l.b16 %v22
  %v57 = vunpack.c.l.b16 %v23
  %v58 = vunpack.c.l.b16 %v24
  %v59 = vunpack.c.l.b16 %v25
  %v60 = vunpack.c.l.b16 %v26
  %v61 = vunpack.c.l.b16 %v27
  %v62 = vunpack.c.l.b16 %v28
  %v63 = vunpack.c.l.b16 %v29
  %v64 = vunpack.c.l.b16 %v30
  %v65 = vunpack.c.l.b16 %v31
  %v66 = vunpack.c.l.b16 %v32
  %v67 = vunpack.c.l.b16 %v33
  %v68 = vpack.c.b16 %v53, %v52
  %v69 = vpack.c.b16 %v55, %v54
  %v70 = vpack.c.b16 %v57, %v56
  %v71 = vpack.c.b16 %v59, %v58
  %v72 = vpack.c.b16 %v61, %v60
  %v73 = vpack.c.b16 %v63, %v62
  %v74 = vpack.c.b16 %v65, %v64
  %v75 = vpack.c.b16 %v67, %v66
  %v78 = vunpack.c.l.b16 %v34
  %v79 = vunpack.c.l.b16 %v35
  %v80 = vpack.c.b16 %v79, %v78
  %vm82 = vcmask 130048
  %v84 = vsel %vm82, %v68, 0
  %v87 = vsel %vm82, %v69, 0
  %v90 = vsel %vm82, %v70, 0
  %v93 = vsel %vm82, %v71, 0
  %v96 = vsel %vm82, %v72, 0
  %v99 = vsel %vm82, %v73, 0
  %v102 = vsel %vm82, %v74, 0
  %v105 = vsel %vm82, %v75, 0
  %107 = vmatprep.subr.bf16.mxu0 0
  %108 = vmatpush1.bf16.msra.mxu0 0
  %109 = vmatprep.subr.bf16.mxu0 0
  %110 = vmatpush1.bf16.msra.mxu0 0
  %111 = vmatprep.subr.bf16.mxu0 0
  %112 = vmatpush1.bf16.msra.mxu0 0
  %113 = vmatprep.subr.bf16.mxu0 0
  %114 = vmatpush1.bf16.msra.mxu0 0
  %115 = vmatprep.subr.bf16.mxu0 0
  %116 = vmatpush1.bf16.msra.mxu0 0
  %117 = vmatprep.subr.bf16.mxu0 0
  %118 = vmatpush1.bf16.msra.mxu0 0
  %119 = vmatprep.subr.bf16.mxu0 0
  %120 = vmatpush1.bf16.msra.mxu0 0
  %121 = vmatprep.subr.bf16.mxu0 0
  %122 = vmatpush1.bf16.msra.mxu0 %v80
  %123 = vmatprep.subr.bf16.mxu0 0
  %124 = vmatpush2.bf16.msra.mxu0 0
  %125 = vmatprep.subr.bf16.mxu0 0
  %126 = vmatpush2.bf16.msra.mxu0 0
  %127 = vmatprep.subr.bf16.mxu0 0
  %128 = vmatpush2.bf16.msra.mxu0 0
  %129 = vmatprep.subr.bf16.mxu0 0
  %130 = vmatpush2.bf16.msra.mxu0 0
  %131 = vmatprep.subr.bf16.mxu0 0
  %132 = vmatpush2.bf16.msra.mxu0 0
  %133 = vmatprep.subr.bf16.mxu0 0
  %134 = vmatpush2.bf16.msra.mxu0 0
  %135 = vmatprep.subr.bf16.mxu0 0
  %136 = vmatpush2.bf16.msra.mxu0 0
  %137 = vmatprep.subr.bf16.mxu0 0
  %138 = vmatpush2.bf16.msra.mxu0 0
  %139 = vmatprep.mubr.bf16.mxu0 0
  %140 = vmatmul.mubr.bf16.gmra.mxu0 %v84
  %v141 = vpop.f32.mrf.mxu0
  %v142 = vadd.f32 0.0, %v141
  %v143 = vpop.f32.mrf.mxu0
  %v144 = vpop.f32.mrf.mxu0
  %v145 = vadd.f32 0.0, %v144
  %v146 = vpop.f32.mrf.mxu0
  %147 = vmatprep.mubr.bf16.mxu0 0
  %148 = vmatmul.mubr.bf16.gmra.mxu0 %v87
  %v149 = vpop.f32.mrf.mxu0
  %v150 = vadd.f32 0.0, %v149
  %v151 = vpop.f32.mrf.mxu0
  %v152 = vpop.f32.mrf.mxu0
  %v153 = vadd.f32 0.0, %v152
  %v154 = vpop.f32.mrf.mxu0
  %155 = vmatprep.mubr.bf16.mxu0 0
  %156 = vmatmul.mubr.bf16.gmra.mxu0 %v90
  %v157 = vpop.f32.mrf.mxu0
  %v158 = vadd.f32 0.0, %v157
  %v159 = vpop.f32.mrf.mxu0
  %v160 = vpop.f32.mrf.mxu0
  %v161 = vadd.f32 0.0, %v160
  %v162 = vpop.f32.mrf.mxu0
  %163 = vmatprep.mubr.bf16.mxu0 0
  %164 = vmatmul.mubr.bf16.gmra.mxu0 %v93
  %v165 = vpop.f32.mrf.mxu0
  %v166 = vadd.f32 0.0, %v165
  %v167 = vpop.f32.mrf.mxu0
  %v168 = vpop.f32.mrf.mxu0
  %v169 = vadd.f32 0.0, %v168
  %v170 = vpop.f32.mrf.mxu0
  %171 = vmatprep.mubr.bf16.mxu0 0
  %172 = vmatmul.mubr.bf16.gmra.mxu0 %v96
  %v173 = vpop.f32.mrf.mxu0
  %v174 = vadd.f32 0.0, %v173
  %v175 = vpop.f32.mrf.mxu0
  %v176 = vpop.f32.mrf.mxu0
  %v177 = vadd.f32 0.0, %v176
  %v178 = vpop.f32.mrf.mxu0
  %179 = vmatprep.mubr.bf16.mxu0 0
  %180 = vmatmul.mubr.bf16.gmra.mxu0 %v99
  %v181 = vpop.f32.mrf.mxu0
  %v182 = vadd.f32 0.0, %v181
  %v183 = vpop.f32.mrf.mxu0
  %v184 = vpop.f32.mrf.mxu0
  %v185 = vadd.f32 0.0, %v184
  %v186 = vpop.f32.mrf.mxu0
  %187 = vmatprep.mubr.bf16.mxu0 0
  %188 = vmatmul.mubr.bf16.gmra.mxu0 %v102
  %v189 = vpop.f32.mrf.mxu0
  %v190 = vadd.f32 0.0, %v189
  %v191 = vpop.f32.mrf.mxu0
  %v192 = vpop.f32.mrf.mxu0
  %v193 = vadd.f32 0.0, %v192
  %v194 = vpop.f32.mrf.mxu0
  %195 = vmatprep.mubr.bf16.mxu0 0
  %196 = vmatmul.mubr.bf16.gmra.mxu0 %v105
  %v197 = vpop.f32.mrf.mxu0
  %v198 = vadd.f32 0.0, %v197
  %v199 = vpop.f32.mrf.mxu0
  %v200 = vpop.f32.mrf.mxu0
  %v201 = vadd.f32 0.0, %v200
  %v202 = vpop.f32.mrf.mxu0
  %203 = vdwg.mxu0
  %v204 = vld [vmem:[%s2] sm:$0x1]
  %v205 = vld [vmem:[%s3] sm:$0x1]
  %v207 = vlaneseq
  %v208 = vshrl.u32 %v207, 7
  %v209 = vsub.s32 0, %v208
  %v210 = vrot.slane %v204, %v209
  %v212 = vmul.f32 %v142, %v210
  %v213 = vmul.f32 %v145, %v210
  %v214 = vmul.f32 %v150, %v210
  %v215 = vmul.f32 %v153, %v210
  %v216 = vmul.f32 %v158, %v210
  %v217 = vmul.f32 %v161, %v210
  %v218 = vmul.f32 %v166, %v210
  %v219 = vmul.f32 %v169, %v210
  %v220 = vmul.f32 %v174, %v210
  %v221 = vmul.f32 %v177, %v210
  %v222 = vmul.f32 %v182, %v210
  %v223 = vmul.f32 %v185, %v210
  %v224 = vmul.f32 %v190, %v210
  %v225 = vmul.f32 %v193, %v210
  %v226 = vmul.f32 %v198, %v210
  %v227 = vmul.f32 %v201, %v210
  %v229 = vlaneseq
  %v230 = vshrl.u32 %v229, 7
  %v231 = vsub.s32 0, %v230
  %v232 = vrot.slane %v205, %v231
  %v234 = vadd.f32 %v212, %v232
  %v235 = vadd.f32 %v213, %v232
  %v236 = vadd.f32 %v214, %v232
  %v237 = vadd.f32 %v215, %v232
  %v238 = vadd.f32 %v216, %v232
  %v239 = vadd.f32 %v217, %v232
  %v240 = vadd.f32 %v218, %v232
  %v241 = vadd.f32 %v219, %v232
  %v242 = vadd.f32 %v220, %v232
  %v243 = vadd.f32 %v221, %v232
  %v244 = vadd.f32 %v222, %v232
  %v245 = vadd.f32 %v223, %v232
  %v246 = vadd.f32 %v224, %v232
  %v247 = vadd.f32 %v225, %v232
  %v248 = vadd.f32 %v226, %v232
  %v249 = vadd.f32 %v227, %v232
  %v250 = vxor.u32 %v234, 2147483648
  %v251 = vxor.u32 %v235, 2147483648
  %v252 = vxor.u32 %v236, 2147483648
  %v253 = vxor.u32 %v237, 2147483648
  %v254 = vxor.u32 %v238, 2147483648
  %v255 = vxor.u32 %v239, 2147483648
  %v256 = vxor.u32 %v240, 2147483648
  %v257 = vxor.u32 %v241, 2147483648
  %v258 = vxor.u32 %v242, 2147483648
  %v259 = vxor.u32 %v243, 2147483648
  %v260 = vxor.u32 %v244, 2147483648
  %v261 = vxor.u32 %v245, 2147483648
  %v262 = vxor.u32 %v246, 2147483648
  %v263 = vxor.u32 %v247, 2147483648
  %v264 = vxor.u32 %v248, 2147483648
  %v265 = vxor.u32 %v249, 2147483648
  %v266 = vmul.f32 %v250, 1.442695
  %v267 = vpow.pop %v266
  %v268 = vmul.f32 %v251, 1.442695
  %v269 = vpow.pop %v268
  %v270 = vmul.f32 %v252, 1.442695
  %v271 = vpow.pop %v270
  %v272 = vmul.f32 %v253, 1.442695
  %v273 = vpow.pop %v272
  %v274 = vmul.f32 %v254, 1.442695
  %v275 = vpow.pop %v274
  %v276 = vmul.f32 %v255, 1.442695
  %v277 = vpow.pop %v276
  %v278 = vmul.f32 %v256, 1.442695
  %v279 = vpow.pop %v278
  %v280 = vmul.f32 %v257, 1.442695
  %v281 = vpow.pop %v280
  %v282 = vmul.f32 %v258, 1.442695
  %v283 = vpow.pop %v282
  %v284 = vmul.f32 %v259, 1.442695
  %v285 = vpow.pop %v284
  %v286 = vmul.f32 %v260, 1.442695
  %v287 = vpow.pop %v286
  %v288 = vmul.f32 %v261, 1.442695
  %v289 = vpow.pop %v288
  %v290 = vmul.f32 %v262, 1.442695
  %v291 = vpow.pop %v290
  %v292 = vmul.f32 %v263, 1.442695
  %v293 = vpow.pop %v292
  %v294 = vmul.f32 %v264, 1.442695
  %v295 = vpow.pop %v294
  %v296 = vmul.f32 %v265, 1.442695
  %v297 = vpow.pop %v296
  %v298 = vadd.f32 %v267, 1.0
  %v299 = vadd.f32 %v269, 1.0
  %v300 = vadd.f32 %v271, 1.0
  %v301 = vadd.f32 %v273, 1.0
  %v302 = vadd.f32 %v275, 1.0
  %v303 = vadd.f32 %v277, 1.0
  %v304 = vadd.f32 %v279, 1.0
  %v305 = vadd.f32 %v281, 1.0
  %v306 = vadd.f32 %v283, 1.0
  %v307 = vadd.f32 %v285, 1.0
  %v308 = vadd.f32 %v287, 1.0
  %v309 = vadd.f32 %v289, 1.0
  %v310 = vadd.f32 %v291, 1.0
  %v311 = vadd.f32 %v293, 1.0
  %v312 = vadd.f32 %v295, 1.0
  %v313 = vadd.f32 %v297, 1.0
  %v314 = vrcp.pop %v298
  %v315 = vmul.f32 1.0, %v314
  %v316 = vrcp.pop %v299
  %v317 = vmul.f32 1.0, %v316
  %v318 = vrcp.pop %v300
  %v319 = vmul.f32 1.0, %v318
  %v320 = vrcp.pop %v301
  %v321 = vmul.f32 1.0, %v320
  %v322 = vrcp.pop %v302
  %v323 = vmul.f32 1.0, %v322
  %v324 = vrcp.pop %v303
  %v325 = vmul.f32 1.0, %v324
  %v326 = vrcp.pop %v304
  %v327 = vmul.f32 1.0, %v326
  %v328 = vrcp.pop %v305
  %v329 = vmul.f32 1.0, %v328
  %v330 = vrcp.pop %v306
  %v331 = vmul.f32 1.0, %v330
  %v332 = vrcp.pop %v307
  %v333 = vmul.f32 1.0, %v332
  %v334 = vrcp.pop %v308
  %v335 = vmul.f32 1.0, %v334
  %v336 = vrcp.pop %v309
  %v337 = vmul.f32 1.0, %v336
  %v338 = vrcp.pop %v310
  %v339 = vmul.f32 1.0, %v338
  %v340 = vrcp.pop %v311
  %v341 = vmul.f32 1.0, %v340
  %v342 = vrcp.pop %v312
  %v343 = vmul.f32 1.0, %v342
  %v344 = vrcp.pop %v313
  %v345 = vmul.f32 1.0, %v344
  %v346 = vmul.f32 %v234, %v315
  %v347 = vmul.f32 %v235, %v317
  %v348 = vmul.f32 %v236, %v319
  %v349 = vmul.f32 %v237, %v321
  %v350 = vmul.f32 %v238, %v323
  %v351 = vmul.f32 %v239, %v325
  %v352 = vmul.f32 %v240, %v327
  %v353 = vmul.f32 %v241, %v329
  %v354 = vmul.f32 %v242, %v331
  %v355 = vmul.f32 %v243, %v333
  %v356 = vmul.f32 %v244, %v335
  %v357 = vmul.f32 %v245, %v337
  %v358 = vmul.f32 %v246, %v339
  %v359 = vmul.f32 %v247, %v341
  %v360 = vmul.f32 %v248, %v343
  %v361 = vmul.f32 %v249, %v345
  %v362 = vpack.c.bf16 %v347, %v346
  %v363 = vpack.c.bf16 %v349, %v348
  %v364 = vpack.c.bf16 %v351, %v350
  %v365 = vpack.c.bf16 %v353, %v352
  %v366 = vpack.c.bf16 %v355, %v354
  %v367 = vpack.c.bf16 %v357, %v356
  %v368 = vpack.c.bf16 %v359, %v358
  %v369 = vpack.c.bf16 %v361, %v360
  %v378 = vunpack.c.l.b16 %v362
  %v379 = vunpack.c.h.b16 %v362
  %v380 = vunpack.c.l.b16 %v363
  %v381 = vunpack.c.h.b16 %v363
  %v382 = vunpack.c.l.b16 %v364
  %v383 = vunpack.c.h.b16 %v364
  %v384 = vunpack.c.l.b16 %v365
  %v385 = vunpack.c.h.b16 %v365
  %v386 = vunpack.c.l.b16 %v366
  %v387 = vunpack.c.h.b16 %v366
  %v388 = vunpack.c.l.b16 %v367
  %v389 = vunpack.c.h.b16 %v367
  %v390 = vunpack.c.l.b16 %v368
  %v391 = vunpack.c.h.b16 %v368
  %v392 = vunpack.c.l.b16 %v369
  %v393 = vunpack.c.h.b16 %v369
  %v394 = vpack.c.b16 %v378, %v378
  %v395 = vpack.c.b16 %v379, %v379
  %v396 = vpack.c.b16 %v380, %v380
  %v397 = vpack.c.b16 %v381, %v381
  %v398 = vpack.c.b16 %v382, %v382
  %v399 = vpack.c.b16 %v383, %v383
  %v400 = vpack.c.b16 %v384, %v384
  %v401 = vpack.c.b16 %v385, %v385
  %v402 = vpack.c.b16 %v386, %v386
  %v403 = vpack.c.b16 %v387, %v387
  %v404 = vpack.c.b16 %v388, %v388
  %v405 = vpack.c.b16 %v389, %v389
  %v406 = vpack.c.b16 %v390, %v390
  %v407 = vpack.c.b16 %v391, %v391
  %v408 = vpack.c.b16 %v392, %v392
  %v409 = vpack.c.b16 %v393, %v393
  %vm426 = vcmask 60416
  %427 = vst.msk [vmem:[%s4] sm:$0xf] %vm426, %v394
  %428 = vst.msk [vmem:[%s4 + $0x4] sm:$0xf] %vm426, %v395
  %429 = vst.msk [vmem:[%s4 + $0x8] sm:$0xf] %vm426, %v396
  %430 = vst.msk [vmem:[%s4 + $0xc] sm:$0xf] %vm426, %v397
  %431 = vst.msk [vmem:[%s4 + $0x10] sm:$0xf] %vm426, %v398
  %432 = vst.msk [vmem:[%s4 + $0x14] sm:$0xf] %vm426, %v399
  %433 = vst.msk [vmem:[%s4 + $0x18] sm:$0xf] %vm426, %v400
  %434 = vst.msk [vmem:[%s4 + $0x1c] sm:$0xf] %vm426, %v401
  %435 = vst.msk [vmem:[%s4 + $0x20] sm:$0xf] %vm426, %v402
  %436 = vst.msk [vmem:[%s4 + $0x24] sm:$0xf] %vm426, %v403
  %437 = vst.msk [vmem:[%s4 + $0x28] sm:$0xf] %vm426, %v404
  %438 = vst.msk [vmem:[%s4 + $0x2c] sm:$0xf] %vm426, %v405
  %439 = vst.msk [vmem:[%s4 + $0x30] sm:$0xf] %vm426, %v406
  %440 = vst.msk [vmem:[%s4 + $0x34] sm:$0xf] %vm426, %v407
  %441 = vst.msk [vmem:[%s4 + $0x38] sm:$0xf] %vm426, %v408
  %442 = vst.msk [vmem:[%s4 + $0x3c] sm:$0xf] %vm426, %v409
  // Predicated region
  $region18: #{tpu_custom_call.1} parent=0 // pred_check
    _
  $region19: #{tpu_custom_call.1} parent=0 // pred_check_branch
    %444 = sbr.rel (0) target = $region21
  $region20: #{tpu_custom_call.1} parent=0 // pred_region
    _
  $region21: #{tpu_custom_call.1} parent=0 // pred_fallthru
    _
  // Predicated region
  $region22: #{tpu_custom_call.1} parent=0 // pred_check
    _
  $region23: #{tpu_custom_call.1} parent=0 // pred_check_branch
    %446 = sbr.rel (0) target = $region25
  $region24: #{tpu_custom_call.1} parent=0 // pred_region
    _
  $region25: #{tpu_custom_call.1} parent=0 // pred_fallthru
    _

</llo_original>
